<compile_context>
chip_gen: v6e
topology: v6e:2x2x1
jax: 0.10.0
libtpu: 0.0.40
codegen_flags: <defaults>
</compile_context>

<pallas_src>
import jax
import jax.numpy as jnp
from jax.experimental import pallas as pl
from jax.experimental.pallas import tpu as pltpu

LANE = 128
SUBLANE = 8


def _round_up(x, m):
    return (x + m - 1) // m * m


def _cdiv(a, b):
    return (a + b - 1) // b


def _vmem_capacity_bytes():
    try:
        return int(pltpu.get_tpu_info().vmem_capacity_bytes)
    except Exception:
        return 64 * 1024 * 1024  # conservative: valid on all generations (v7x = 64 MiB/TC)


# ----------------------------------------------------------------------------
# pl.Buffered(1) support probe (single-buffer resident weights).  Cached.
# ----------------------------------------------------------------------------
_BUFFERED_SUPPORTED = None


def _probe_kernel(x_ref, o_ref):
    o_ref[...] = x_ref[...] + 1.0


def _buffered_supported():
    global _BUFFERED_SUPPORTED
    if _BUFFERED_SUPPORTED is None:
        try:
            spec = pl.BlockSpec((8, 128), lambda i: (0, 0),
                                pipeline_mode=pl.Buffered(1))
            out = pl.pallas_call(
                _probe_kernel,
                out_shape=jax.ShapeDtypeStruct((8, 128), jnp.float32),
                grid=(1,),
                in_specs=[spec],
                out_specs=pl.BlockSpec((8, 128), lambda i: (0, 0)),
            )(jnp.zeros((8, 128), jnp.float32))
            jax.block_until_ready(out)
            _BUFFERED_SUPPORTED = True
        except Exception:
            _BUFFERED_SUPPORTED = False
    return _BUFFERED_SUPPORTED


def _resident_spec(shape, index_map):
    """BlockSpec for a weight-like input whose block index never changes along
    the (inner) batch axis: single-buffered when supported."""
    if _buffered_supported():
        return pl.BlockSpec(shape, index_map, pipeline_mode=pl.Buffered(1))
    return pl.BlockSpec(shape, index_map)


# ----------------------------------------------------------------------------
# Kernel
# ----------------------------------------------------------------------------
def lstm_cell_kernel(x_ref, h_ref, c_ref, wih_ref, whh_ref, b_ref,
                     new_h_ref, new_c_ref):
    """One (batch tile, hidden tile) of the LSTM cell.

    x_ref   : (TB, D)            activations
    h_ref   : (TB, Hpp)          padded previous hidden state
    c_ref   : (TB, HT)           cell-state slab for this hidden tile
    wih_ref : (D,  4*HT)         W_ih^T columns for this hidden tile, [i|f|g|o]
    whh_ref : (Hpp, 4*HT)        W_hh^T columns for this hidden tile
    b_ref   : (1,  4*HT)         bias row (f32, kept full precision)
    """
    wdt = wih_ref.dtype
    # Two MXU contractions, f32 accumulation; bias added as one broadcast VPU add.
    ifgo = jnp.dot(x_ref[...].astype(wdt), wih_ref[...],
                   preferred_element_type=jnp.float32)
    ifgo = ifgo + jnp.dot(h_ref[...].astype(wdt), whh_ref[...],
                          preferred_element_type=jnp.float32)
    ifgo = ifgo + b_ref[...]

    ht = new_c_ref.shape[-1]
    # Each gate slab is HT (multiple of 128) lanes wide -> lane-aligned slices.
    i = jax.nn.sigmoid(ifgo[:, 0 * ht:1 * ht])
    f = jax.nn.sigmoid(ifgo[:, 1 * ht:2 * ht])
    g = jnp.tanh(ifgo[:, 2 * ht:3 * ht])
    o = jax.nn.sigmoid(ifgo[:, 3 * ht:4 * ht])

    c = c_ref[...].astype(jnp.float32)
    new_c = f * c + i * g
    new_h = o * jnp.tanh(new_c)

    new_h_ref[...] = new_h.astype(new_h_ref.dtype)
    new_c_ref[...] = new_c.astype(new_c_ref.dtype)   # f32 cell state


# ----------------------------------------------------------------------------
# One-time parameter preparation (call OUTSIDE the per-timestep hot path)
# ----------------------------------------------------------------------------
def prepare_lstm_params(weight_ih, weight_hh, bias, *,
                        compute_dtype=jnp.bfloat16, hidden_tile=None):
    """weight_ih: (4H, D), weight_hh: (4H, H), bias: (4H,) in torch layout
    (gate order [i, f, g, o]).

    Weights are transposed, lane-padded and laid out hidden-tile-major:
    column = n*4*HT + gate*HT + t, so that grid tile n sees a contiguous
    (.., 4*HT) slab holding all four gates for hidden indices [n*HT, (n+1)*HT).
    NOTE: per-gate padding H -> Hpp is multiplied by 4 in the N dimension; for
    H far from a multiple of 128 this inflates weight bytes and gate math.
    """
    four_h, D = weight_ih.shape
    H = four_h // 4
    assert weight_hh.shape == (four_h, H) and bias.shape == (four_h,)

    Hp = _round_up(H, LANE)
    w_itemsize = jnp.dtype(compute_dtype).itemsize

    if hidden_tile is None:
        # Keep the resident weight slab within ~40% of VMEM (rest goes to
        # streamed activation tiles, f32 intermediates and headroom).
        cap = _vmem_capacity_bytes()
        budget = int(0.40 * cap)
        full_bytes = (D + Hp) * 4 * Hp * w_itemsize
        if full_bytes <= budget:
            HT = Hp
        else:
            num_n = _cdiv(full_bytes, budget)
            HT = _round_up(_cdiv(Hp, num_n), LANE)
    else:
        HT = _round_up(min(int(hidden_tile), Hp), LANE)

    num_n = _cdiv(Hp, HT)
    Hpp = num_n * HT
    pad_h = Hpp - H

    # (4H, ...) -> (4, H, ...) -> pad hidden to Hpp.
    w_ih4 = jnp.pad(weight_ih.reshape(4, H, D), ((0, 0), (0, pad_h), (0, 0)))
    w_hh4 = jnp.pad(weight_hh.reshape(4, H, H), ((0, 0), (0, pad_h), (0, pad_h)))
    b4 = jnp.pad(bias.reshape(4, H), ((0, 0), (0, pad_h)))

    # Hidden-tile-major column layout: col = n*4*HT + g*HT + t.
    w_ih_t = (w_ih4.reshape(4, num_n, HT, D)
              .transpose(3, 1, 0, 2).reshape(D, num_n * 4 * HT))
    w_hh_t = (w_hh4.reshape(4, num_n, HT, Hpp)
              .transpose(3, 1, 0, 2).reshape(Hpp, num_n * 4 * HT))
    b_row = (b4.reshape(4, num_n, HT)
             .transpose(1, 0, 2).reshape(1, num_n * 4 * HT)).astype(jnp.float32)

    return {
        "w_ih_t": w_ih_t.astype(compute_dtype),
        "w_hh_t": w_hh_t.astype(compute_dtype),
        "b_row": b_row,                 # bias kept in f32 even for bf16 weights
        "D": D, "H": H, "Hp": Hpp, "HT": HT, "num_n": num_n,
    }


# ----------------------------------------------------------------------------
# Wrappers
# ----------------------------------------------------------------------------
def _pick_batch_tile(B, per_row_bytes, act_budget_bytes):
    """>= 2 batch tiles whenever possible (lets 'parallel' grid axes split over
    the two v7x TensorCores); 256 rows for very large batches when VMEM allows
    (fills a 256-wide MXU on v6e/v7x); otherwise 128."""
    bp0 = _round_up(B, SUBLANE)
    if bp0 <= 2 * SUBLANE:
        return bp0
    if bp0 <= 2 * 128:
        return _round_up(_cdiv(bp0, 2), SUBLANE)
    if B >= 512 and per_row_bytes * 256 <= act_budget_bytes:
        return 256
    return 128


def lstm_cell_padded(x, h_pad, c_pad, params):
    """Padded-layout LSTM cell step (recommended for recurrent loops).

    x: (B, D);  h_pad: (B, Hpp);  c_pad: (B, Hpp) (any float dtype, promoted
    to f32 in-kernel).  Returns (new_h_pad (B, Hpp) in h_pad.dtype,
    new_c_pad (B, Hpp) in f32) — feed these directly into the next step.
    """
    w_ih, w_hh, b_row = params["w_ih_t"], params["w_hh_t"], params["b_row"]
    D, Hpp, HT, num_n = params["D"], params["Hp"], params["HT"], params["num_n"]
    B = x.shape[0]
    assert x.shape == (B, D)
    assert h_pad.shape == (B, Hpp) and c_pad.shape == (B, Hpp)
    assert w_ih.shape == (D, 4 * Hpp) and w_hh.shape == (Hpp, 4 * Hpp)
    out_dtype = h_pad.dtype

    w_is = jnp.dtype(w_ih.dtype).itemsize
    act_is = jnp.dtype(x.dtype).itemsize
    h_is = jnp.dtype(out_dtype).itemsize
    c_is = jnp.dtype(c_pad.dtype).itemsize

    cap = _vmem_capacity_bytes()
    n_buf = 1 if _buffered_supported() else 2
    weight_bytes = n_buf * ((D + Hpp) * 4 * HT * w_is + 4 * HT * 4)

    # Per-batch-row VMEM: double-buffered streamed tiles + f32 intermediates.
    per_row = (2 * (D * act_is + Hpp * h_is + HT * c_is)   # x, h, c inputs
               + 2 * (HT * h_is + HT * 4)                  # new_h, new_c outputs
               + 6 * 4 * HT * 4)                           # f32 ifgo + gate temps
    act_budget = max(0, int(0.85 * cap) - weight_bytes)
    TB = _pick_batch_tile(B, per_row, act_budget)
    Bp = _round_up(B, TB)
    num_b = Bp // TB

    est = weight_bytes + TB * per_row
    vmem_limit = int(min(0.9 * cap, max(32 * 1024 * 1024, 1.5 * est)))

    if Bp != B:
        x = jnp.pad(x, ((0, Bp - B), (0, 0)))
        h_pad = jnp.pad(h_pad, ((0, Bp - B), (0, 0)))
        c_pad = jnp.pad(c_pad, ((0, Bp - B), (0, 0)))

    # Grid: hidden tiles (outer) x batch tiles (inner).  Weight blocks are
    # indexed by n only -> they stay resident in VMEM while the batch streams.
    in_specs = [
        pl.BlockSpec((TB, D), lambda n, b: (b, 0)),          # x tile
        pl.BlockSpec((TB, Hpp), lambda n, b: (b, 0)),        # h tile (full width)
        pl.BlockSpec((TB, HT), lambda n, b: (b, n)),         # c slab
        _resident_spec((D, 4 * HT), lambda n, b: (0, n)),    # W_ih^T slab
        _resident_spec((Hpp, 4 * HT), lambda n, b: (0, n)),  # W_hh^T slab
        _resident_spec((1, 4 * HT), lambda n, b: (0, n)),    # bias row (f32)
    ]
    out_specs = (
        pl.BlockSpec((TB, HT), lambda n, b: (b, n)),
        pl.BlockSpec((TB, HT), lambda n, b: (b, n)),
    )

    new_h_pad, new_c_pad = pl.pallas_call(
        lstm_cell_kernel,
        out_shape=(jax.ShapeDtypeStruct((Bp, Hpp), out_dtype),
                   jax.ShapeDtypeStruct((Bp, Hpp), jnp.float32)),
        grid=(num_n, num_b),
        in_specs=in_specs,
        out_specs=out_specs,
        compiler_params=pltpu.CompilerParams(
            dimension_semantics=("parallel", "parallel"),
            vmem_limit_bytes=vmem_limit,
        ),
    )(x, h_pad, c_pad, w_ih, w_hh, b_row)

    if Bp != B:
        new_h_pad = new_h_pad[:B]
        new_c_pad = new_c_pad[:B]
    return new_h_pad, new_c_pad


def lstm_cell(x, h, c, params):
    """Unpadded convenience wrapper matching the torch module.
    x: (B, D), h/c: (B, H) -> (new_h (B, H) in h.dtype, new_c (B, H) in f32)."""
    H, Hpp = params["H"], params["Hp"]
    pad = Hpp - H
    h_pad = jnp.pad(h, ((0, 0), (0, pad))) if pad else h
    c_pad = jnp.pad(c, ((0, 0), (0, pad))) if pad else c
    new_h_pad, new_c_pad = lstm_cell_padded(x, h_pad, c_pad, params)
    if pad:
        return new_h_pad[:, :H], new_c_pad[:, :H]
    return new_h_pad, new_c_pad


# ----------------------------------------------------------------------------
# Pure-JAX reference (torch semantics)
# ----------------------------------------------------------------------------
def lstm_cell_ref(x, h, c, weight_ih, weight_hh, bias):
    hi = jax.lax.Precision.HIGHEST
    ifgo = (jnp.dot(x, weight_ih.T, precision=hi) + bias
            + jnp.dot(h, weight_hh.T, precision=hi))
    H = h.shape[-1]
    i, f, g, o = (ifgo[:, k * H:(k + 1) * H] for k in range(4))
    i = jax.nn.sigmoid(i)
    f = jax.nn.sigmoid(f)
    g = jnp.tanh(g)
    o = jax.nn.sigmoid(o)
    new_c = f * c + i * g
    new_h = o * jnp.tanh(new_c)
    return new_h, new_c


if __name__ == "__main__":
    _buffered_supported()  # run the Buffered(1) probe once, outside jit

    key = jax.random.PRNGKey(0)
    kx, kh, kc, kwi, kwh = jax.random.split(key, 5)

    # --- Test 1: f32 weights, module-sized shapes ----------------------------
    B, D, H = 8, 16, 32
    x = jax.random.normal(kx, (B, D), dtype=jnp.float32)
    h = jax.random.normal(kh, (B, H), dtype=jnp.float32)
    c = jax.random.normal(kc, (B, H), dtype=jnp.float32)
    weight_ih = jax.random.normal(kwi, (4 * H, D), dtype=jnp.float32)
    weight_hh = jax.random.normal(kwh, (4 * H, H), dtype=jnp.float32)
    bias = jnp.zeros((4 * H,), dtype=jnp.float32)

    ref_h, ref_c = lstm_cell_ref(x, h, c, weight_ih, weight_hh, bias)

    params_f32 = prepare_lstm_params(weight_ih, weight_hh, bias,
                                     compute_dtype=jnp.float32)
    step = jax.jit(lambda x_, h_, c_: lstm_cell(x_, h_, c_, params_f32))
    new_h, new_c = step(x, h, c)
    jax.block_until_ready((new_h, new_c))
    assert new_h.shape == (B, H) and new_c.shape == (B, H)
    assert jnp.allclose(new_h, ref_h, atol=1e-4, rtol=1e-4)
    assert jnp.allclose(new_c, ref_c, atol=1e-4, rtol=1e-4)

    # --- Test 2: hidden (N) tiling + >= 2 batch tiles, f32 -------------------
    B2, D2, H2 = 24, 16, 256
    k2 = jax.random.split(jax.random.PRNGKey(0), 5)
    x2 = jax.random.normal(k2[0], (B2, D2), dtype=jnp.float32)
    h2 = jax.random.normal(k2[1], (B2, H2), dtype=jnp.float32)
    c2 = jax.random.normal(k2[2], (B2, H2), dtype=jnp.float32)
    w_ih2 = jax.random.normal(k2[3], (4 * H2, D2), dtype=jnp.float32) * 0.1
    w_hh2 = jax.random.normal(k2[4], (4 * H2, H2), dtype=jnp.float32) * 0.1
    bias2 = jnp.zeros((4 * H2,), dtype=jnp.float32)

    ref_h2, ref_c2 = lstm_cell_ref(x2, h2, c2, w_ih2, w_hh2, bias2)
    params2 = prepare_lstm_params(w_ih2, w_hh2, bias2,
                                  compute_dtype=jnp.float32, hidden_tile=128)
    assert params2["num_n"] == 2
    nh2, nc2 = lstm_cell(x2, h2, c2, params2)
    jax.block_until_ready((nh2, nc2))
    assert jnp.allclose(nh2, ref_h2, atol=1e-3, rtol=1e-3)
    assert jnp.allclose(nc2, ref_c2, atol=1e-3, rtol=1e-3)

    # --- Test 3: default bf16 weight path (halves weight HBM traffic) --------
    params_bf16 = prepare_lstm_params(weight_ih, weight_hh, bias)  # bf16 default
    bh, bc = lstm_cell(x, h, c, params_bf16)
    jax.block_until_ready((bh, bc))
    assert bool(jnp.all(jnp.isfinite(bh))) and bool(jnp.all(jnp.isfinite(bc)))
    assert float(jnp.mean(jnp.abs(bh - ref_h))) < 0.15
    assert float(jnp.mean(jnp.abs(bc - ref_c))) < 0.15

    # --- Recurrent usage: keep h/c in the padded layout between steps --------
    Hpp = params_bf16["Hp"]
    h_run = jnp.pad(h, ((0, 0), (0, Hpp - H)))
    c_run = jnp.pad(c, ((0, 0), (0, Hpp - H)))
    for _ in range(3):
        h_run, c_run = lstm_cell_padded(x, h_run, c_run, params_bf16)
    jax.block_until_ready((h_run, c_run))
    assert bool(jnp.all(jnp.isfinite(h_run))) and bool(jnp.all(jnp.isfinite(c_run)))

    print("KERNEL_OK")
</pallas_src>

<mosaic_0001>
module attributes {stable_mosaic.version = 11 : i64} {
  func.func @_probe_kernel(%arg0: i32, %arg1: memref<8x128xf32, #tpu.memory_space<vmem>>, %arg2: memref<8x128xf32, #tpu.memory_space<vmem>>) attributes {dimension_semantics = [#tpu.dimension_semantics<arbitrary>], iteration_bounds = array<i64: 1>, scalar_prefetch = 0 : i64, scratch_operands = 0 : i64, tpu.core_type = #tpu.core_type<tc>, window_params = [{pipeline_mode = #tpu.pipeline_mode<synchronous>, transform_indices = @transform_0, window_bounds = array<i64: 8, 128>}, {pipeline_mode = #tpu.pipeline_mode<synchronous>, transform_indices = @transform_1, window_bounds = array<i64: 8, 128>}]} {
    %c0 = arith.constant 0 : index
    %c0_0 = arith.constant 0 : index
    %0 = vector.load %arg1[%c0, %c0_0] : memref<8x128xf32, #tpu.memory_space<vmem>>, vector<8x128xf32>
    %cst = arith.constant 1.000000e+00 : f32
    %1 = vector.broadcast %cst : f32 to vector<8x128xf32>
    %2 = arith.addf %0, %1 : vector<8x128xf32>
    %c0_1 = arith.constant 0 : index
    %c0_2 = arith.constant 0 : index
    %3 = vector.load %arg2[%c0_1, %c0_2] : memref<8x128xf32, #tpu.memory_space<vmem>>, vector<8x128xf32>
    tpu.vector_store %arg2[%c0_1, %c0_2], %2 {strides = array<i32>} : memref<8x128xf32, #tpu.memory_space<vmem>>, vector<8x128xf32>,
    return
  }
  func.func @transform_0(%arg0: i32) -> (i32, i32) {
    %c0_i32 = arith.constant 0 : i32
    %c0_i32_0 = arith.constant 0 : i32
    %c0_i32_1 = arith.constant 0 : i32
    return %c0_i32, %c0_i32_0 : i32, i32
  }
  func.func @transform_1(%arg0: i32) -> (i32, i32) {
    %c0_i32 = arith.constant 0 : i32
    %c0_i32_0 = arith.constant 0 : i32
    %c0_i32_1 = arith.constant 0 : i32
    return %c0_i32, %c0_i32_0 : i32, i32
  }
}

module attributes {stable_mosaic.version = 11 : i64} {
  func.func @lstm_cell_kernel(%arg0: i32, %arg1: i32, %arg2: memref<8x16xf32, #tpu.memory_space<vmem>>, %arg3: memref<8x128xf32, #tpu.memory_space<vmem>>, %arg4: memref<8x128xf32, #tpu.memory_space<vmem>>, %arg5: memref<16x512xf32, #tpu.memory_space<vmem>>, %arg6: memref<128x512xf32, #tpu.memory_space<vmem>>, %arg7: memref<1x512xf32, #tpu.memory_space<vmem>>, %arg8: memref<8x128xf32, #tpu.memory_space<vmem>>, %arg9: memref<8x128xf32, #tpu.memory_space<vmem>>) attributes {dimension_semantics = [#tpu.dimension_semantics<parallel>, #tpu.dimension_semantics<parallel>], iteration_bounds = array<i64: 1, 1>, scalar_prefetch = 0 : i64, scratch_operands = 0 : i64, tpu.core_type = #tpu.core_type<tc>, window_params = [{transform_indices = @transform_0, window_bounds = array<i64: 8, 16>}, {transform_indices = @transform_1, window_bounds = array<i64: 8, 128>}, {transform_indices = @transform_2, window_bounds = array<i64: 8, 128>}, {transform_indices = @transform_3, window_bounds = array<i64: 16, 512>}, {transform_indices = @transform_4, window_bounds = array<i64: 128, 512>}, {transform_indices = @transform_5, window_bounds = array<i64: 1, 512>}, {transform_indices = @transform_6, window_bounds = array<i64: 8, 128>}, {transform_indices = @transform_7, window_bounds = array<i64: 8, 128>}]} {
    %c0 = arith.constant 0 : index
    %c0_0 = arith.constant 0 : index
    %0 = vector.load %arg2[%c0, %c0_0] : memref<8x16xf32, #tpu.memory_space<vmem>>, vector<8x16xf32>
    %c0_1 = arith.constant 0 : index
    %c0_2 = arith.constant 0 : index
    %1 = vector.load %arg5[%c0_1, %c0_2] : memref<16x512xf32, #tpu.memory_space<vmem>>, vector<16x512xf32>
    %cst = arith.constant dense<0.000000e+00> : vector<8x512xf32>
    %2 = tpu.matmul %0, %1, %cst {dimension_numbers = #tpu.dot_dimension_numbers<[1], [0], [0], [1], [0, 0, 1, 1], [], []>} : vector<8x16xf32>, vector<16x512xf32>, vector<8x512xf32> -> vector<8x512xf32>
    %c0_3 = arith.constant 0 : index
    %c0_4 = arith.constant 0 : index
    %3 = vector.load %arg3[%c0_3, %c0_4] : memref<8x128xf32, #tpu.memory_space<vmem>>, vector<8x128xf32>
    %c0_5 = arith.constant 0 : index
    %c0_6 = arith.constant 0 : index
    %4 = vector.load %arg6[%c0_5, %c0_6] : memref<128x512xf32, #tpu.memory_space<vmem>>, vector<128x512xf32>
    %cst_7 = arith.constant dense<0.000000e+00> : vector<8x512xf32>
    %5 = tpu.matmul %3, %4, %cst_7 {dimension_numbers = #tpu.dot_dimension_numbers<[1], [0], [0], [1], [0, 0, 1, 1], [], []>} : vector<8x128xf32>, vector<128x512xf32>, vector<8x512xf32> -> vector<8x512xf32>
    %6 = arith.addf %2, %5 : vector<8x512xf32>
    %c0_8 = arith.constant 0 : index
    %c0_9 = arith.constant 0 : index
    %7 = vector.load %arg7[%c0_8, %c0_9] : memref<1x512xf32, #tpu.memory_space<vmem>>, vector<1x512xf32>
    %8 = vector.broadcast %7 : vector<1x512xf32> to vector<8x512xf32>
    %9 = arith.addf %6, %8 : vector<8x512xf32>
    %10 = vector.extract_strided_slice %9 {offsets = [0, 0], sizes = [8, 128], strides = [1, 1]} : vector<8x512xf32> to vector<8x128xf32>
    %11 = arith.negf %10 : vector<8x128xf32>
    %12 = math.exp %11 : vector<8x128xf32>
    %cst_10 = arith.constant 1.000000e+00 : f32
    %13 = vector.broadcast %cst_10 : f32 to vector<8x128xf32>
    %14 = arith.addf %13, %12 : vector<8x128xf32>
    %15 = arith.divf %13, %14 : vector<8x128xf32>
    %16 = vector.extract_strided_slice %9 {offsets = [0, 128], sizes = [8, 128], strides = [1, 1]} : vector<8x512xf32> to vector<8x128xf32>
    %17 = arith.negf %16 : vector<8x128xf32>
    %18 = math.exp %17 : vector<8x128xf32>
    %cst_11 = arith.constant 1.000000e+00 : f32
    %19 = vector.broadcast %cst_11 : f32 to vector<8x128xf32>
    %20 = arith.addf %19, %18 : vector<8x128xf32>
    %21 = arith.divf %19, %20 : vector<8x128xf32>
    %22 = vector.extract_strided_slice %9 {offsets = [0, 256], sizes = [8, 128], strides = [1, 1]} : vector<8x512xf32> to vector<8x128xf32>
    %23 = math.tanh %22 : vector<8x128xf32>
    %24 = vector.extract_strided_slice %9 {offsets = [0, 384], sizes = [8, 128], strides = [1, 1]} : vector<8x512xf32> to vector<8x128xf32>
    %25 = arith.negf %24 : vector<8x128xf32>
    %26 = math.exp %25 : vector<8x128xf32>
    %cst_12 = arith.constant 1.000000e+00 : f32
    %27 = vector.broadcast %cst_12 : f32 to vector<8x128xf32>
    %28 = arith.addf %27, %26 : vector<8x128xf32>
    %29 = arith.divf %27, %28 : vector<8x128xf32>
    %c0_13 = arith.constant 0 : index
    %c0_14 = arith.constant 0 : index
    %30 = vector.load %arg4[%c0_13, %c0_14] : memref<8x128xf32, #tpu.memory_space<vmem>>, vector<8x128xf32>
    %31 = arith.mulf %21, %30 : vector<8x128xf32>
    %32 = arith.mulf %15, %23 : vector<8x128xf32>
    %33 = arith.addf %31, %32 : vector<8x128xf32>
    %34 = math.tanh %33 : vector<8x128xf32>
    %35 = arith.mulf %29, %34 : vector<8x128xf32>
    %c0_15 = arith.constant 0 : index
    %c0_16 = arith.constant 0 : index
    %36 = vector.load %arg8[%c0_15, %c0_16] : memref<8x128xf32, #tpu.memory_space<vmem>>, vector<8x128xf32>
    tpu.vector_store %arg8[%c0_15, %c0_16], %35 {strides = array<i32>} : memref<8x128xf32, #tpu.memory_space<vmem>>, vector<8x128xf32>,
    %c0_17 = arith.constant 0 : index
    %c0_18 = arith.constant 0 : index
    %37 = vector.load %arg9[%c0_17, %c0_18] : memref<8x128xf32, #tpu.memory_space<vmem>>, vector<8x128xf32>
    tpu.vector_store %arg9[%c0_17, %c0_18], %33 {strides = array<i32>} : memref<8x128xf32, #tpu.memory_space<vmem>>, vector<8x128xf32>,
    return
  }
  func.func @transform_0(%arg0: i32, %arg1: i32) -> (i32, i32) {
    %c0_i32 = arith.constant 0 : i32
    %c0_i32_0 = arith.constant 0 : i32
    return %arg1, %c0_i32 : i32, i32
  }
  func.func @transform_1(%arg0: i32, %arg1: i32) -> (i32, i32) {
    %c0_i32 = arith.constant 0 : i32
    %c0_i32_0 = arith.constant 0 : i32
    return %arg1, %c0_i32 : i32, i32
  }
  func.func @transform_2(%arg0: i32, %arg1: i32) -> (i32, i32) {
    %c0_i32 = arith.constant 0 : i32
    return %arg1, %arg0 : i32, i32
  }
  func.func @transform_3(%arg0: i32, %arg1: i32) -> (i32, i32) {
    %c0_i32 = arith.constant 0 : i32
    %c0_i32_0 = arith.constant 0 : i32
    return %c0_i32, %arg0 : i32, i32
  }
  func.func @transform_4(%arg0: i32, %arg1: i32) -> (i32, i32) {
    %c0_i32 = arith.constant 0 : i32
    %c0_i32_0 = arith.constant 0 : i32
    return %c0_i32, %arg0 : i32, i32
  }
  func.func @transform_5(%arg0: i32, %arg1: i32) -> (i32, i32) {
    %c0_i32 = arith.constant 0 : i32
    %c0_i32_0 = arith.constant 0 : i32
    return %c0_i32, %arg0 : i32, i32
  }
  func.func @transform_6(%arg0: i32, %arg1: i32) -> (i32, i32) {
    %c0_i32 = arith.constant 0 : i32
    return %arg1, %arg0 : i32, i32
  }
  func.func @transform_7(%arg0: i32, %arg1: i32) -> (i32, i32) {
    %c0_i32 = arith.constant 0 : i32
    return %arg1, %arg0 : i32, i32
  }
}

</mosaic_0001>

<llo_original>
// kernel: tpu_custom_call.1
$region0: #{tpu_custom_call.1}
  #allocation0 [shape = 'u32[]', space=smem, size = 0x4, offset = 0x4, fixed_abs, tag = 'smem constant byte address 0x4 - core index']
  #allocation1 [shape = 'u32[144,128]{1,0:T(1,128)}', space=vmem, size = 0x12000, scoped, tag = 'internal scratch']
  %s0 = inlined_call_operand.hbm [shape: f32[8,128], index: 0, kind: input, shape index: {}]
  %s1 = inlined_call_operand.hbm [shape: f32[8,128], index: 1, kind: output, shape index: {}]
  %s2 = sld [smem:[#allocation0]]
  $region18: #{tpu_custom_call.1} parent=0
    _
  %s4 = ssub.s32 1, %s2
  %s5 = scalar_select 0, %s4, %s2
  $region1: #{tpu_custom_call.1} parent=0
    #allocation2 [shape = 'u8[4096]{0}', space=vmem, size = 0x1000, scoped, tag = 'input window, operand 0, single buffered']
    #allocation3 [shape = 's32[1]{0}', space=sflag, size = 0x4, scoped, tag = 'scoped memory for tpu_custom_call.1']
    #allocation4 [shape = 's32[1]{0}', space=sflag, size = 0x4, scoped, tag = 'scoped memory for tpu_custom_call.1']
    #allocation5 [shape = 'u8[4096]{0}', space=vmem, size = 0x1000, scoped, tag = 'output window, operand 0, single buffered']
    %6 = vsyncpa [#allocation3], 0
    %7 = vsyncpa [#allocation4], 0
    // Predicated region
    $region2: #{tpu_custom_call.1} parent=1 // pred_check
      _
    $region3: #{tpu_custom_call.1} parent=1 // pred_check_branch
      %9 = sbr.rel (0) target = $region5
    $region4: #{tpu_custom_call.1} parent=1 // pred_region
      %s11 = ssub.s32 128, 128
      %12 = vsyncadd [#allocation3], %s11
      %s14 = sshll.u32 [#allocation2], 4
      %s15 = int_to_ptr.vmem [resolvable:$true] %s14
      %17 = dma.hbm_to_vmem [thread:$0]  %s0, 128, %s15, [#allocation3]
    $region5: #{tpu_custom_call.1} parent=1 // pred_fallthru
      _
    // Predicated region
    $region6: #{tpu_custom_call.1} parent=1 // pred_check
      _
    $region7: #{tpu_custom_call.1} parent=1 // pred_check_branch
      %19 = sbr.rel (0) target = $region9
    $region8: #{tpu_custom_call.1} parent=1 // pred_region
      %20 = dma.done [#allocation3], 128
    $region9: #{tpu_custom_call.1} parent=1 // pred_fallthru
      _
    %v21 = vld [vmem:[#allocation2] sm:$0xff]
    %v22 = vadd.f32 %v21, 1.0
    %23 = vst [vmem:[#allocation5] sm:$0xff] %v22
    // Predicated region
    $region10: #{tpu_custom_call.1} parent=1 // pred_check
      _
    $region11: #{tpu_custom_call.1} parent=1 // pred_check_branch
      %25 = sbr.rel (0) target = $region13
    $region12: #{tpu_custom_call.1} parent=1 // pred_region
      %s27 = ssub.s32 128, 128
      %28 = vsyncadd [#allocation4], %s27
      %s30 = sshll.u32 [#allocation5], 4
      %s31 = int_to_ptr.vmem [resolvable:$true] %s30
      %33 = dma.vmem_to_hbm [thread:$0]  %s31, 128, %s1, [#allocation4]
    $region13: #{tpu_custom_call.1} parent=1 // pred_fallthru
      _
    // Predicated region
    $region14: #{tpu_custom_call.1} parent=1 // pred_check
      _
    $region15: #{tpu_custom_call.1} parent=1 // pred_check_branch
      %35 = sbr.rel (0) target = $region17
    $region16: #{tpu_custom_call.1} parent=1 // pred_region
      %36 = dma.done [#allocation4], 128
    $region17: #{tpu_custom_call.1} parent=1 // pred_fallthru
      _
    %37 = vsyncpa [#allocation3], 1
    %38 = vsyncpa [#allocation4], 1

// kernel: _lambda_.1
$region0: #{_lambda_.1}
  #allocation0 [shape = 'u32[]', space=smem, size = 0x4, offset = 0x4, fixed_abs, tag = 'smem constant byte address 0x4 - core index']
  #allocation1 [shape = 'u32[144,128]{1,0:T(1,128)}', space=vmem, size = 0x12000, scoped, tag = 'internal scratch']
  %s0 = inlined_call_operand.vmem [shape: f32[8,16], index: 0, kind: input, shape index: {}]
  %s1 = inlined_call_operand.vmem [shape: f32[8,128], index: 1, kind: input, shape index: {}]
  %s2 = inlined_call_operand.vmem [shape: f32[8,128], index: 2, kind: input, shape index: {}]
  %s3 = inlined_call_operand.hbm [shape: f32[16,512], index: 3, kind: input, shape index: {}]
  %s4 = inlined_call_operand.hbm [shape: f32[128,512], index: 4, kind: input, shape index: {}]
  %s5 = inlined_call_operand.vmem [shape: f32[1,512], index: 5, kind: input, shape index: {}]
  %s6 = inlined_call_operand.hbm [shape: f32[8,128], index: 6, kind: output, shape index: {0}]
  %s7 = inlined_call_operand.hbm [shape: f32[8,128], index: 7, kind: output, shape index: {1}]
  %8 = xla_tuple %s6, %s7
  %s9 = sld [smem:[#allocation0]]
  $region50: #{_lambda_.1} parent=0
    _
  %s11 = ssub.s32 1, %s9
  %s12 = scalar_select 0, %s11, %s9
  $region1: #{_lambda_.1} parent=0
    #allocation2 [shape = 'u8[32768]{0}', space=vmem, size = 0x8000, scoped, tag = 'input window, operand 3, single buffered']
    #allocation3 [shape = 's32[1]{0}', space=sflag, size = 0x4, scoped, tag = 'scoped memory for _lambda_.1']
    #allocation4 [shape = 's32[1]{0}', space=sflag, size = 0x4, scoped, tag = 'scoped memory for _lambda_.1']
    #allocation5 [shape = 'u8[262144]{0}', space=vmem, size = 0x40000, scoped, tag = 'input window, operand 4, single buffered']
    #allocation6 [shape = 's32[1]{0}', space=sflag, size = 0x4, scoped, tag = 'scoped memory for _lambda_.1']
    #allocation7 [shape = 'u8[4096]{0}', space=vmem, size = 0x1000, scoped, tag = 'output window, operand 0, single buffered']
    #allocation8 [shape = 'u8[4096]{0}', space=vmem, size = 0x1000, scoped, tag = 'output window, operand 1, single buffered']
    #allocation9 [shape = 's32[1]{0}', space=sflag, size = 0x4, scoped, tag = 'scoped memory for _lambda_.1']
    %13 = vsyncpa [#allocation3], 0
    %14 = vsyncpa [#allocation6], 0
    %15 = vsyncpa [#allocation4], 0
    %16 = vsyncpa [#allocation9], 0
    // Predicated region
    $region2: #{_lambda_.1} parent=1 // pred_check
      _
    $region3: #{_lambda_.1} parent=1 // pred_check_branch
      %18 = sbr.rel (0) target = $region5
    $region4: #{_lambda_.1} parent=1 // pred_region
      _
    $region5: #{_lambda_.1} parent=1 // pred_fallthru
      _
    // Predicated region
    $region6: #{_lambda_.1} parent=1 // pred_check
      _
    $region7: #{_lambda_.1} parent=1 // pred_check_branch
      %20 = sbr.rel (0) target = $region9
    $region8: #{_lambda_.1} parent=1 // pred_region
      _
    $region9: #{_lambda_.1} parent=1 // pred_fallthru
      _
    // Predicated region
    $region10: #{_lambda_.1} parent=1 // pred_check
      _
    $region11: #{_lambda_.1} parent=1 // pred_check_branch
      %22 = sbr.rel (0) target = $region13
    $region12: #{_lambda_.1} parent=1 // pred_region
      _
    $region13: #{_lambda_.1} parent=1 // pred_fallthru
      _
    // Predicated region
    $region14: #{_lambda_.1} parent=1 // pred_check
      _
    $region15: #{_lambda_.1} parent=1 // pred_check_branch
      %24 = sbr.rel (0) target = $region17
    $region16: #{_lambda_.1} parent=1 // pred_region
      %s26 = ssub.s32 1024, 1024
      %27 = vsyncadd [#allocation3], %s26
      %s28 = sshll.u32 [#allocation2], 4
      %s29 = int_to_ptr.vmem [resolvable:$true] %s28
      %34 = dma.hbm_to_vmem [thread:$0]  %s3, 1024, %s29, [#allocation3], 512, 512, 32
    $region17: #{_lambda_.1} parent=1 // pred_fallthru
      _
    // Predicated region
    $region18: #{_lambda_.1} parent=1 // pred_check
      _
    $region19: #{_lambda_.1} parent=1 // pred_check_branch
      %36 = sbr.rel (0) target = $region21
    $region20: #{_lambda_.1} parent=1 // pred_region
      %s38 = ssub.s32 8192, 8192
      %39 = vsyncadd [#allocation6], %s38
      %s40 = sshll.u32 [#allocation5], 4
      %s41 = int_to_ptr.vmem [resolvable:$true] %s40
      %46 = dma.hbm_to_vmem [thread:$0]  %s4, 8192, %s41, [#allocation6], 512, 512, 32
    $region21: #{_lambda_.1} parent=1 // pred_fallthru
      _
    // Predicated region
    $region22: #{_lambda_.1} parent=1 // pred_check
      _
    $region23: #{_lambda_.1} parent=1 // pred_check_branch
      %48 = sbr.rel (0) target = $region25
    $region24: #{_lambda_.1} parent=1 // pred_region
      _
    $region25: #{_lambda_.1} parent=1 // pred_fallthru
      _
    // Predicated region
    $region26: #{_lambda_.1} parent=1 // pred_check
      _
    $region27: #{_lambda_.1} parent=1 // pred_check_branch
      %50 = sbr.rel (0) target = $region29
    $region28: #{_lambda_.1} parent=1 // pred_region
      %51 = dma.done [#allocation3], 1024
    $region29: #{_lambda_.1} parent=1 // pred_fallthru
      _
    // Predicated region
    $region30: #{_lambda_.1} parent=1 // pred_check
      _
    $region31: #{_lambda_.1} parent=1 // pred_check_branch
      %53 = sbr.rel (0) target = $region33
    $region32: #{_lambda_.1} parent=1 // pred_region
      %54 = dma.done [#allocation6], 8192
    $region33: #{_lambda_.1} parent=1 // pred_fallthru
      _
    %v55 = vld [vmem:[%s0] sm:$0xff]
    %v56 = vld [vmem:[#allocation2] sm:$0xff]
    %v57 = vld [vmem:[#allocation2 + $0x8] sm:$0xff]
    %v58 = vld [vmem:[#allocation2 + $0x10] sm:$0xff]
    %v59 = vld [vmem:[#allocation2 + $0x18] sm:$0xff]
    %v60 = vld [vmem:[#allocation2 + $0x20] sm:$0xff]
    %v61 = vld [vmem:[#allocation2 + $0x28] sm:$0xff]
    %v62 = vld [vmem:[#allocation2 + $0x30] sm:$0xff]
    %v63 = vld [vmem:[#allocation2 + $0x38] sm:$0xff]
    %v64 = vld [vmem:[%s1] sm:$0xff]
    %v65 = vld [vmem:[#allocation5] sm:$0xff]
    %v66 = vld [vmem:[#allocation5 + $0x8] sm:$0xff]
    %v67 = vld [vmem:[#allocation5 + $0x10] sm:$0xff]
    %v68 = vld [vmem:[#allocation5 + $0x18] sm:$0xff]
    %v69 = vld [vmem:[#allocation5 + $0x20] sm:$0xff]
    %v70 = vld [vmem:[#allocation5 + $0x28] sm:$0xff]
    %v71 = vld [vmem:[#allocation5 + $0x30] sm:$0xff]
    %v72 = vld [vmem:[#allocation5 + $0x38] sm:$0xff]
    %v73 = vld [vmem:[#allocation5 + $0x40] sm:$0xff]
    %v74 = vld [vmem:[#allocation5 + $0x48] sm:$0xff]
    %v75 = vld [vmem:[#allocation5 + $0x50] sm:$0xff]
    %v76 = vld [vmem:[#allocation5 + $0x58] sm:$0xff]
    %v77 = vld [vmem:[#allocation5 + $0x60] sm:$0xff]
    %v78 = vld [vmem:[#allocation5 + $0x68] sm:$0xff]
    %v79 = vld [vmem:[#allocation5 + $0x70] sm:$0xff]
    %v80 = vld [vmem:[#allocation5 + $0x78] sm:$0xff]
    %v81 = vld [vmem:[#allocation5 + $0x80] sm:$0xff]
    %v82 = vld [vmem:[#allocation5 + $0x88] sm:$0xff]
    %v83 = vld [vmem:[#allocation5 + $0x90] sm:$0xff]
    %v84 = vld [vmem:[#allocation5 + $0x98] sm:$0xff]
    %v85 = vld [vmem:[#allocation5 + $0xa0] sm:$0xff]
    %v86 = vld [vmem:[#allocation5 + $0xa8] sm:$0xff]
    %v87 = vld [vmem:[#allocation5 + $0xb0] sm:$0xff]
    %v88 = vld [vmem:[#allocation5 + $0xb8] sm:$0xff]
    %v89 = vld [vmem:[#allocation5 + $0xc0] sm:$0xff]
    %v90 = vld [vmem:[#allocation5 + $0xc8] sm:$0xff]
    %v91 = vld [vmem:[#allocation5 + $0xd0] sm:$0xff]
    %v92 = vld [vmem:[#allocation5 + $0xd8] sm:$0xff]
    %v93 = vld [vmem:[#allocation5 + $0xe0] sm:$0xff]
    %v94 = vld [vmem:[#allocation5 + $0xe8] sm:$0xff]
    %v95 = vld [vmem:[#allocation5 + $0xf0] sm:$0xff]
    %v96 = vld [vmem:[#allocation5 + $0xf8] sm:$0xff]
    %v97 = vld [vmem:[#allocation5 + $0x100] sm:$0xff]
    %v98 = vld [vmem:[#allocation5 + $0x108] sm:$0xff]
    %v99 = vld [vmem:[#allocation5 + $0x110] sm:$0xff]
    %v100 = vld [vmem:[#allocation5 + $0x118] sm:$0xff]
    %v101 = vld [vmem:[#allocation5 + $0x120] sm:$0xff]
    %v102 = vld [vmem:[#allocation5 + $0x128] sm:$0xff]
    %v103 = vld [vmem:[#allocation5 + $0x130] sm:$0xff]
    %v104 = vld [vmem:[#allocation5 + $0x138] sm:$0xff]
    %v105 = vld [vmem:[#allocation5 + $0x140] sm:$0xff]
    %v106 = vld [vmem:[#allocation5 + $0x148] sm:$0xff]
    %v107 = vld [vmem:[#allocation5 + $0x150] sm:$0xff]
    %v108 = vld [vmem:[#allocation5 + $0x158] sm:$0xff]
    %v109 = vld [vmem:[#allocation5 + $0x160] sm:$0xff]
    %v110 = vld [vmem:[#allocation5 + $0x168] sm:$0xff]
    %v111 = vld [vmem:[#allocation5 + $0x170] sm:$0xff]
    %v112 = vld [vmem:[#allocation5 + $0x178] sm:$0xff]
    %v113 = vld [vmem:[#allocation5 + $0x180] sm:$0xff]
    %v114 = vld [vmem:[#allocation5 + $0x188] sm:$0xff]
    %v115 = vld [vmem:[#allocation5 + $0x190] sm:$0xff]
    %v116 = vld [vmem:[#allocation5 + $0x198] sm:$0xff]
    %v117 = vld [vmem:[#allocation5 + $0x1a0] sm:$0xff]
    %v118 = vld [vmem:[#allocation5 + $0x1a8] sm:$0xff]
    %v119 = vld [vmem:[#allocation5 + $0x1b0] sm:$0xff]
    %v120 = vld [vmem:[#allocation5 + $0x1b8] sm:$0xff]
    %v121 = vld [vmem:[#allocation5 + $0x1c0] sm:$0xff]
    %v122 = vld [vmem:[#allocation5 + $0x1c8] sm:$0xff]
    %v123 = vld [vmem:[#allocation5 + $0x1d0] sm:$0xff]
    %v124 = vld [vmem:[#allocation5 + $0x1d8] sm:$0xff]
    %v125 = vld [vmem:[#allocation5 + $0x1e0] sm:$0xff]
    %v126 = vld [vmem:[#allocation5 + $0x1e8] sm:$0xff]
    %v127 = vld [vmem:[#allocation5 + $0x1f0] sm:$0xff]
    %v128 = vld [vmem:[#allocation5 + $0x1f8] sm:$0xff]
    %129 = vmatprep.subr.mxu0 %v126
    %130 = vmatpush1.msra.mxu0 %v125
    %131 = vmatprep.subr.mxu0 %v122
    %132 = vmatpush1.msra.mxu0 %v121
    %133 = vmatprep.subr.mxu0 %v118
    %134 = vmatpush1.msra.mxu0 %v117
    %135 = vmatprep.subr.mxu0 %v114
    %136 = vmatpush1.msra.mxu0 %v113
    %137 = vmatprep.subr.mxu0 %v110
    %138 = vmatpush1.msra.mxu0 %v109
    %139 = vmatprep.subr.mxu0 %v106
    %140 = vmatpush1.msra.mxu0 %v105
    %141 = vmatprep.subr.mxu0 %v102
    %142 = vmatpush1.msra.mxu0 %v101
    %143 = vmatprep.subr.mxu0 %v98
    %144 = vmatpush1.msra.mxu0 %v97
    %145 = vmatprep.subr.mxu0 %v94
    %146 = vmatpush1.msra.mxu0 %v93
    %147 = vmatprep.subr.mxu0 %v90
    %148 = vmatpush1.msra.mxu0 %v89
    %149 = vmatprep.subr.mxu0 %v86
    %150 = vmatpush1.msra.mxu0 %v85
    %151 = vmatprep.subr.mxu0 %v82
    %152 = vmatpush1.msra.mxu0 %v81
    %153 = vmatprep.subr.mxu0 %v78
    %154 = vmatpush1.msra.mxu0 %v77
    %155 = vmatprep.subr.mxu0 %v74
    %156 = vmatpush1.msra.mxu0 %v73
    %157 = vmatprep.subr.mxu0 %v70
    %158 = vmatpush1.msra.mxu0 %v69
    %159 = vmatprep.subr.mxu0 %v66
    %160 = vmatpush1.msra.mxu0 %v65
    %161 = vmatprep.subr.mxu0 0.0
    %162 = vmatpush2.msra.mxu0 0.0
    %163 = vmatprep.subr.mxu0 0.0
    %164 = vmatpush2.msra.mxu0 0.0
    %165 = vmatprep.subr.mxu0 0.0
    %166 = vmatpush2.msra.mxu0 0.0
    %167 = vmatprep.subr.mxu0 0.0
    %168 = vmatpush2.msra.mxu0 0.0
    %169 = vmatprep.subr.mxu0 0.0
    %170 = vmatpush2.msra.mxu0 0.0
    %171 = vmatprep.subr.mxu0 0.0
    %172 = vmatpush2.msra.mxu0 0.0
    %173 = vmatprep.subr.mxu0 0.0
    %174 = vmatpush2.msra.mxu0 0.0
    %175 = vmatprep.subr.mxu0 0.0
    %176 = vmatpush2.msra.mxu0 0.0
    %177 = vmatprep.subr.mxu0 0.0
    %178 = vmatpush2.msra.mxu0 0.0
    %179 = vmatprep.subr.mxu0 0.0
    %180 = vmatpush2.msra.mxu0 0.0
    %181 = vmatprep.subr.mxu0 0.0
    %182 = vmatpush2.msra.mxu0 0.0
    %183 = vmatprep.subr.mxu0 0.0
    %184 = vmatpush2.msra.mxu0 0.0
    %185 = vmatprep.subr.mxu0 0.0
    %186 = vmatpush2.msra.mxu0 0.0
    %187 = vmatprep.subr.mxu0 0.0
    %188 = vmatpush2.msra.mxu0 0.0
    %189 = vmatprep.subr.mxu0 0.0
    %190 = vmatpush2.msra.mxu0 0.0
    %191 = vmatprep.subr.mxu0 0.0
    %192 = vmatpush2.msra.mxu0 0.0
    %193 = vmatprep.mubr.f32.mxu0 0.0
    %194 = vmatmul.mubr.f32.gmra.mxu0 %v64
    %v195 = vpop.f32.mrf.mxu0
    %v196 = vadd.f32 0.0, %v195
    %v197 = vpop.f32.mrf.mxu0
    %v198 = vadd.f32 0.0, %v197
    %199 = vdwg.mxu0
    %200 = vmatprep.subr.mxu0 %v128
    %201 = vmatpush1.msra.mxu0 %v127
    %202 = vmatprep.subr.mxu0 %v124
    %203 = vmatpush1.msra.mxu0 %v123
    %204 = vmatprep.subr.mxu0 %v120
    %205 = vmatpush1.msra.mxu0 %v119
    %206 = vmatprep.subr.mxu0 %v116
    %207 = vmatpush1.msra.mxu0 %v115
    %208 = vmatprep.subr.mxu0 %v112
    %209 = vmatpush1.msra.mxu0 %v111
    %210 = vmatprep.subr.mxu0 %v108
    %211 = vmatpush1.msra.mxu0 %v107
    %212 = vmatprep.subr.mxu0 %v104
    %213 = vmatpush1.msra.mxu0 %v103
    %214 = vmatprep.subr.mxu0 %v100
    %215 = vmatpush1.msra.mxu0 %v99
    %216 = vmatprep.subr.mxu0 %v96
    %217 = vmatpush1.msra.mxu0 %v95
    %218 = vmatprep.subr.mxu0 %v92
    %219 = vmatpush1.msra.mxu0 %v91
    %220 = vmatprep.subr.mxu0 %v88
    %221 = vmatpush1.msra.mxu0 %v87
    %222 = vmatprep.subr.mxu0 %v84
    %223 = vmatpush1.msra.mxu0 %v83
    %224 = vmatprep.subr.mxu0 %v80
    %225 = vmatpush1.msra.mxu0 %v79
    %226 = vmatprep.subr.mxu0 %v76
    %227 = vmatpush1.msra.mxu0 %v75
    %228 = vmatprep.subr.mxu0 %v72
    %229 = vmatpush1.msra.mxu0 %v71
    %230 = vmatprep.subr.mxu0 %v68
    %231 = vmatpush1.msra.mxu0 %v67
    %232 = vmatprep.subr.mxu0 0.0
    %233 = vmatpush2.msra.mxu0 0.0
    %234 = vmatprep.subr.mxu0 0.0
    %235 = vmatpush2.msra.mxu0 0.0
    %236 = vmatprep.subr.mxu0 0.0
    %237 = vmatpush2.msra.mxu0 0.0
    %238 = vmatprep.subr.mxu0 0.0
    %239 = vmatpush2.msra.mxu0 0.0
    %240 = vmatprep.subr.mxu0 0.0
    %241 = vmatpush2.msra.mxu0 0.0
    %242 = vmatprep.subr.mxu0 0.0
    %243 = vmatpush2.msra.mxu0 0.0
    %244 = vmatprep.subr.mxu0 0.0
    %245 = vmatpush2.msra.mxu0 0.0
    %246 = vmatprep.subr.mxu0 0.0
    %247 = vmatpush2.msra.mxu0 0.0
    %248 = vmatprep.subr.mxu0 0.0
    %249 = vmatpush2.msra.mxu0 0.0
    %250 = vmatprep.subr.mxu0 0.0
    %251 = vmatpush2.msra.mxu0 0.0
    %252 = vmatprep.subr.mxu0 0.0
    %253 = vmatpush2.msra.mxu0 0.0
    %254 = vmatprep.subr.mxu0 0.0
    %255 = vmatpush2.msra.mxu0 0.0
    %256 = vmatprep.subr.mxu0 0.0
    %257 = vmatpush2.msra.mxu0 0.0
    %258 = vmatprep.subr.mxu0 0.0
    %259 = vmatpush2.msra.mxu0 0.0
    %260 = vmatprep.subr.mxu0 0.0
    %261 = vmatpush2.msra.mxu0 0.0
    %262 = vmatprep.subr.mxu0 0.0
    %263 = vmatpush2.msra.mxu0 0.0
    %264 = vmatprep.mubr.f32.mxu0 0.0
    %265 = vmatmul.mubr.f32.gmra.mxu0 %v64
    %v266 = vpop.f32.mrf.mxu0
    %v267 = vadd.f32 0.0, %v266
    %v268 = vpop.f32.mrf.mxu0
    %v269 = vadd.f32 0.0, %v268
    %270 = vdwg.mxu0
    %vm271 = vcmask 130048
    %v273 = vsel %vm271, %v55, 0
    %275 = vmatprep.subr.mxu0 0.0
    %276 = vmatpush1.msra.mxu0 0.0
    %277 = vmatprep.subr.mxu0 0.0
    %278 = vmatpush1.msra.mxu0 0.0
    %279 = vmatprep.subr.mxu0 0.0
    %280 = vmatpush1.msra.mxu0 0.0
    %281 = vmatprep.subr.mxu0 0.0
    %282 = vmatpush1.msra.mxu0 0.0
    %283 = vmatprep.subr.mxu0 0.0
    %284 = vmatpush1.msra.mxu0 0.0
    %285 = vmatprep.subr.mxu0 0.0
    %286 = vmatpush1.msra.mxu0 0.0
    %287 = vmatprep.subr.mxu0 0.0
    %288 = vmatpush1.msra.mxu0 0.0
    %289 = vmatprep.subr.mxu0 0.0
    %290 = vmatpush1.msra.mxu0 0.0
    %291 = vmatprep.subr.mxu0 0.0
    %292 = vmatpush1.msra.mxu0 0.0
    %293 = vmatprep.subr.mxu0 0.0
    %294 = vmatpush1.msra.mxu0 0.0
    %295 = vmatprep.subr.mxu0 0.0
    %296 = vmatpush1.msra.mxu0 0.0
    %297 = vmatprep.subr.mxu0 0.0
    %298 = vmatpush1.msra.mxu0 0.0
    %299 = vmatprep.subr.mxu0 0.0
    %300 = vmatpush1.msra.mxu0 0.0
    %301 = vmatprep.subr.mxu0 0.0
    %302 = vmatpush1.msra.mxu0 0.0
    %303 = vmatprep.subr.mxu0 %v61
    %304 = vmatpush1.msra.mxu0 %v60
    %305 = vmatprep.subr.mxu0 %v57
    %306 = vmatpush1.msra.mxu0 %v56
    %307 = vmatprep.subr.mxu0 0.0
    %308 = vmatpush2.msra.mxu0 0.0
    %309 = vmatprep.subr.mxu0 0.0
    %310 = vmatpush2.msra.mxu0 0.0
    %311 = vmatprep.subr.mxu0 0.0
    %312 = vmatpush2.msra.mxu0 0.0
    %313 = vmatprep.subr.mxu0 0.0
    %314 = vmatpush2.msra.mxu0 0.0
    %315 = vmatprep.subr.mxu0 0.0
    %316 = vmatpush2.msra.mxu0 0.0
    %317 = vmatprep.subr.mxu0 0.0
    %318 = vmatpush2.msra.mxu0 0.0
    %319 = vmatprep.subr.mxu0 0.0
    %320 = vmatpush2.msra.mxu0 0.0
    %321 = vmatprep.subr.mxu0 0.0
    %322 = vmatpush2.msra.mxu0 0.0
    %323 = vmatprep.subr.mxu0 0.0
    %324 = vmatpush2.msra.mxu0 0.0
    %325 = vmatprep.subr.mxu0 0.0
    %326 = vmatpush2.msra.mxu0 0.0
    %327 = vmatprep.subr.mxu0 0.0
    %328 = vmatpush2.msra.mxu0 0.0
    %329 = vmatprep.subr.mxu0 0.0
    %330 = vmatpush2.msra.mxu0 0.0
    %331 = vmatprep.subr.mxu0 0.0
    %332 = vmatpush2.msra.mxu0 0.0
    %333 = vmatprep.subr.mxu0 0.0
    %334 = vmatpush2.msra.mxu0 0.0
    %335 = vmatprep.subr.mxu0 0.0
    %336 = vmatpush2.msra.mxu0 0.0
    %337 = vmatprep.subr.mxu0 0.0
    %338 = vmatpush2.msra.mxu0 0.0
    %339 = vmatprep.mubr.f32.mxu0 0.0
    %340 = vmatmul.mubr.f32.gmra.mxu0 %v273
    %v341 = vpop.f32.mrf.mxu0
    %v342 = vadd.f32 %v196, %v341
    %v343 = vpop.f32.mrf.mxu0
    %v344 = vadd.f32 %v198, %v343
    %345 = vdwg.mxu0
    %346 = vmatprep.subr.mxu0 0.0
    %347 = vmatpush1.msra.mxu0 0.0
    %348 = vmatprep.subr.mxu0 0.0
    %349 = vmatpush1.msra.mxu0 0.0
    %350 = vmatprep.subr.mxu0 0.0
    %351 = vmatpush1.msra.mxu0 0.0
    %352 = vmatprep.subr.mxu0 0.0
    %353 = vmatpush1.msra.mxu0 0.0
    %354 = vmatprep.subr.mxu0 0.0
    %355 = vmatpush1.msra.mxu0 0.0
    %356 = vmatprep.subr.mxu0 0.0
    %357 = vmatpush1.msra.mxu0 0.0
    %358 = vmatprep.subr.mxu0 0.0
    %359 = vmatpush1.msra.mxu0 0.0
    %360 = vmatprep.subr.mxu0 0.0
    %361 = vmatpush1.msra.mxu0 0.0
    %362 = vmatprep.subr.mxu0 0.0
    %363 = vmatpush1.msra.mxu0 0.0
    %364 = vmatprep.subr.mxu0 0.0
    %365 = vmatpush1.msra.mxu0 0.0
    %366 = vmatprep.subr.mxu0 0.0
    %367 = vmatpush1.msra.mxu0 0.0
    %368 = vmatprep.subr.mxu0 0.0
    %369 = vmatpush1.msra.mxu0 0.0
    %370 = vmatprep.subr.mxu0 0.0
    %371 = vmatpush1.msra.mxu0 0.0
    %372 = vmatprep.subr.mxu0 0.0
    %373 = vmatpush1.msra.mxu0 0.0
    %374 = vmatprep.subr.mxu0 %v63
    %375 = vmatpush1.msra.mxu0 %v62
    %376 = vmatprep.subr.mxu0 %v59
    %377 = vmatpush1.msra.mxu0 %v58
    %378 = vmatprep.subr.mxu0 0.0
    %379 = vmatpush2.msra.mxu0 0.0
    %380 = vmatprep.subr.mxu0 0.0
    %381 = vmatpush2.msra.mxu0 0.0
    %382 = vmatprep.subr.mxu0 0.0
    %383 = vmatpush2.msra.mxu0 0.0
    %384 = vmatprep.subr.mxu0 0.0
    %385 = vmatpush2.msra.mxu0 0.0
    %386 = vmatprep.subr.mxu0 0.0
    %387 = vmatpush2.msra.mxu0 0.0
    %388 = vmatprep.subr.mxu0 0.0
    %389 = vmatpush2.msra.mxu0 0.0
    %390 = vmatprep.subr.mxu0 0.0
    %391 = vmatpush2.msra.mxu0 0.0
    %392 = vmatprep.subr.mxu0 0.0
    %393 = vmatpush2.msra.mxu0 0.0
    %394 = vmatprep.subr.mxu0 0.0
    %395 = vmatpush2.msra.mxu0 0.0
    %396 = vmatprep.subr.mxu0 0.0
    %397 = vmatpush2.msra.mxu0 0.0
    %398 = vmatprep.subr.mxu0 0.0
    %399 = vmatpush2.msra.mxu0 0.0
    %400 = vmatprep.subr.mxu0 0.0
    %401 = vmatpush2.msra.mxu0 0.0
    %402 = vmatprep.subr.mxu0 0.0
    %403 = vmatpush2.msra.mxu0 0.0
    %404 = vmatprep.subr.mxu0 0.0
    %405 = vmatpush2.msra.mxu0 0.0
    %406 = vmatprep.subr.mxu0 0.0
    %407 = vmatpush2.msra.mxu0 0.0
    %408 = vmatprep.subr.mxu0 0.0
    %409 = vmatpush2.msra.mxu0 0.0
    %410 = vmatprep.mubr.f32.mxu0 0.0
    %411 = vmatmul.mubr.f32.gmra.mxu0 %v273
    %v412 = vpop.f32.mrf.mxu0
    %v413 = vadd.f32 %v267, %v412
    %v414 = vpop.f32.mrf.mxu0
    %v415 = vadd.f32 %v269, %v414
    %416 = vdwg.mxu0
    %v417 = vld [vmem:[%s5] sm:$0xf]
    %v419 = vlaneseq
    %v420 = vshrl.u32 %v419, 7
    %v421 = vsub.s32 0, %v420
    %v422 = vrot.slane %v417, %v421
    %v423 = vlaneseq
    %v424 = vshrl.u32 %v423, 7
    %v425 = vsub.s32 1, %v424
    %v426 = vrot.slane %v417, %v425
    %v427 = vlaneseq
    %v428 = vshrl.u32 %v427, 7
    %v429 = vsub.s32 2, %v428
    %v430 = vrot.slane %v417, %v429
    %v431 = vlaneseq
    %v432 = vshrl.u32 %v431, 7
    %v433 = vsub.s32 3, %v432
    %v434 = vrot.slane %v417, %v433
    %v439 = vadd.f32 %v342, %v422
    %v440 = vadd.f32 %v344, %v426
    %v441 = vadd.f32 %v413, %v430
    %v442 = vadd.f32 %v415, %v434
    %v443 = vxor.u32 %v439, 2147483648
    %v444 = vmul.f32 %v443, 1.442695
    %v445 = vpow.pop %v444
    %v446 = vadd.f32 %v445, 1.0
    %v447 = vrcp.pop %v446
    %v448 = vmul.f32 1.0, %v447
    %v449 = vxor.u32 %v440, 2147483648
    %v450 = vmul.f32 %v449, 1.442695
    %v451 = vpow.pop %v450
    %v452 = vadd.f32 %v451, 1.0
    %v453 = vrcp.pop %v452
    %v454 = vmul.f32 1.0, %v453
    %v455 = vtanh.pop %v441
    %v456 = vxor.u32 %v442, 2147483648
    %v457 = vmul.f32 %v456, 1.442695
    %v458 = vpow.pop %v457
    %v459 = vadd.f32 %v458, 1.0
    %v460 = vrcp.pop %v459
    %v461 = vmul.f32 1.0, %v460
    %v462 = vld [vmem:[%s2] sm:$0xff]
    %v463 = vmul.f32 %v454, %v462
    %v464 = vmul.f32 %v448, %v455
    %v465 = vadd.f32 %v463, %v464
    %v466 = vtanh.pop %v465
    %v467 = vmul.f32 %v461, %v466
    %468 = vst [vmem:[#allocation7] sm:$0xff] %v467
    %469 = vst [vmem:[#allocation8] sm:$0xff] %v465
    // Predicated region
    $region34: #{_lambda_.1} parent=1 // pred_check
      _
    $region35: #{_lambda_.1} parent=1 // pred_check_branch
      %471 = sbr.rel (0) target = $region37
    $region36: #{_lambda_.1} parent=1 // pred_region
      %s473 = ssub.s32 128, 128
      %474 = vsyncadd [#allocation4], %s473
      %s476 = sshll.u32 [#allocation7], 4
      %s477 = int_to_ptr.vmem [resolvable:$true] %s476
      %479 = dma.vmem_to_hbm [thread:$0]  %s477, 128, %s6, [#allocation4]
    $region37: #{_lambda_.1} parent=1 // pred_fallthru
      _
    // Predicated region
    $region38: #{_lambda_.1} parent=1 // pred_check
      _
    $region39: #{_lambda_.1} parent=1 // pred_check_branch
      %481 = sbr.rel (0) target = $region41
    $region40: #{_lambda_.1} parent=1 // pred_region
      %s483 = ssub.s32 128, 128
      %484 = vsyncadd [#allocation9], %s483
      %s486 = sshll.u32 [#allocation8], 4
      %s487 = int_to_ptr.vmem [resolvable:$true] %s486
      %489 = dma.vmem_to_hbm [thread:$0]  %s487, 128, %s7, [#allocation9]
    $region41: #{_lambda_.1} parent=1 // pred_fallthru
      _
    // Predicated region
    $region42: #{_lambda_.1} parent=1 // pred_check
      _
    $region43: #{_lambda_.1} parent=1 // pred_check_branch
      %491 = sbr.rel (0) target = $region45
    $region44: #{_lambda_.1} parent=1 // pred_region
      %492 = dma.done [#allocation4], 128
    $region45: #{_lambda_.1} parent=1 // pred_fallthru
      _
    // Predicated region
    $region46: #{_lambda_.1} parent=1 // pred_check
      _
    $region47: #{_lambda_.1} parent=1 // pred_check_branch
      %494 = sbr.rel (0) target = $region49
    $region48: #{_lambda_.1} parent=1 // pred_region
      %495 = dma.done [#allocation9], 128
    $region49: #{_lambda_.1} parent=1 // pred_fallthru
      _
    %496 = vsyncpa [#allocation3], 1
    %497 = vsyncpa [#allocation6], 1
    %498 = vsyncpa [#allocation4], 1
    %499 = vsyncpa [#allocation9], 1

</llo_original>
